<compile_context>
chip_gen: v7x
topology: tpu7x:2x2x1
jax: 0.10.0
libtpu: 0.0.40
codegen_flags: <defaults>
</compile_context>

<pallas_src>
import math

import jax
import jax.numpy as jnp
from jax.experimental import pallas as pl
from jax.experimental.pallas import tpu as pltpu

EPSILON = 1e-6
LEAKY_THRESHOLD = 1.0  # snn.Leaky default threshold


def snn_tcy_kernel(x_ref, w_ref, b_ref, o_ref):
    # Per grid step (one forward call):
    #   x_ref: (B, D) mel-spectrogram power, w_ref: (C, D) torch Linear.weight,
    #   b_ref: (1, C) bias, o_ref: (B, C) softmax output.
    y = jnp.log(x_ref[...] + EPSILON)                  # EUP

    # Global statistics over ALL elements of this call (torch .mean()/.std(), unbiased).
    n = y.shape[0] * y.shape[1]
    mean = jnp.sum(y) / n
    d = y - mean                                       # reused for var AND spike compare
    var = jnp.sum(d * d) / (n - 1)
    thr_std = LEAKY_THRESHOLD * jnp.sqrt(var)          # scalar

    w = w_ref[...]                                     # (C, D) lane-dense, native layout
    bias = b_ref[...]                                  # (1, C)

    B = y.shape[0]
    for row in range(B):  # B is a static block dim (=2): unrolled at trace time
        # Folded normalization + Leaky first step (mem0 = 0):
        #   spk = H((y-mean)/std - threshold)  <=>  d > threshold*std
        mask = d[row:row + 1, :] > thr_std             # (1, D) boolean spike mask

        # Binary-spike linear layer as a masked lane-reduce (VPU select + XLU reduce)
        # instead of a >98%-padded MXU matmul with a hidden W^T transpose.
        logits = jnp.sum(jnp.where(mask, w, 0.0), axis=-1)[None, :] + bias  # (1, C)

        # Softmax(dim=-1) with an EXACT divide (fixes row-sum property).
        m = jnp.max(logits)
        e = jnp.exp(logits - m)
        o_ref[row:row + 1, :] = e / jnp.sum(e)


def snn_tcy_forward_stacked(mel_specs, w, b):
    """Run many independent SnnTCY forward calls in one pallas_call.

    mel_specs: (num_calls, B, n_freq, n_time) float32 — each leading slice is one
               torch forward call (mean/std computed per call, matching torch).
    w:         (n_classes, D) — torch nn.Linear.weight layout, D = n_freq * n_time.
    b:         (n_classes,).
    Returns (num_calls, B, n_classes).
    """
    N, B, F, T = mel_specs.shape
    D = F * T
    C = w.shape[0]
    x = mel_specs.reshape(N, B, D)     # glue: Flatten layout done outside the kernel
    b2 = b.reshape(1, C)

    return pl.pallas_call(
        snn_tcy_kernel,
        out_shape=jax.ShapeDtypeStruct((N, B, C), jnp.float32),
        grid=(N,),
        in_specs=[
            pl.BlockSpec((None, B, D), lambda n: (n, 0, 0)),   # per-call x tile
            pl.BlockSpec((C, D), lambda n: (0, 0)),            # W resident across grid
            pl.BlockSpec((1, C), lambda n: (0, 0)),            # bias resident
        ],
        out_specs=pl.BlockSpec((None, B, C), lambda n: (n, 0, 0)),
        compiler_params=pltpu.CompilerParams(
            dimension_semantics=("parallel",)),                # megacore-shardable
    )(x, w, b2)


def snn_tcy_forward(mel_spec, w, b):
    """Single forward call (B, n_freq, n_time) -> (B, n_classes)."""
    return snn_tcy_forward_stacked(mel_spec[None], w, b)[0]


def reference_forward(mel_spec, w, b):
    """Pure-JAX reference for one forward call (torch-equivalent math)."""
    B = mel_spec.shape[0]
    y = jnp.log(mel_spec + EPSILON)
    mean = jnp.mean(y)
    std = jnp.sqrt(jnp.sum((y - mean) ** 2) / (y.size - 1))   # unbiased, like torch.std
    yn = (y - mean) / std
    spk = (yn > LEAKY_THRESHOLD).astype(jnp.float32)
    flat = spk.reshape(B, -1)
    logits = flat @ w.T + b
    return jax.nn.softmax(logits, axis=-1)


if __name__ == "__main__":
    # Small shapes consistent with the module defaults (n_freq=60, n_time=41, C=10),
    # with a stack of 4 independent forward calls to exercise the grid axis.
    N_CALLS, B, n_freq, n_time, n_classes = 4, 2, 60, 41, 10
    D = n_freq * n_time

    key = jax.random.PRNGKey(0)
    k_x, k_w, k_b = jax.random.split(key, 3)

    # Synthetic mel-spectrogram power (strictly positive, like a real spectrogram).
    mel_specs = jax.random.uniform(
        k_x, (N_CALLS, B, n_freq, n_time), dtype=jnp.float32, minval=1e-4, maxval=5.0
    )

    # Deterministic nn.Linear-style init: U(-1/sqrt(in_features), 1/sqrt(in_features)),
    # weight in torch-native (n_classes, D) layout (lane-dense last dim in kernel).
    bound = 1.0 / math.sqrt(D)
    w = jax.random.uniform(k_w, (n_classes, D), jnp.float32, -bound, bound)
    b = jax.random.uniform(k_b, (n_classes,), jnp.float32, -bound, bound)

    out = snn_tcy_forward_stacked(mel_specs, w, b)
    out = jax.block_until_ready(out)
    assert out.shape == (N_CALLS, B, n_classes)

    ref = jnp.stack([reference_forward(mel_specs[i], w, b) for i in range(N_CALLS)])
    assert jnp.allclose(out, ref, atol=1e-4, rtol=1e-4), "mismatch vs pure-JAX reference"
    assert jnp.allclose(jnp.sum(out, axis=-1), 1.0, atol=1e-5), "softmax rows must sum to 1"
    assert jnp.all(jnp.argmax(out, axis=-1) == jnp.argmax(ref, axis=-1)), "argmax mismatch"

    # Single-call wrapper consistency (exactly one torch forward).
    single = jax.block_until_ready(snn_tcy_forward(mel_specs[0], w, b))
    assert single.shape == (B, n_classes)
    assert jnp.allclose(single, ref[0], atol=1e-4, rtol=1e-4), "single-call mismatch"

    print("KERNEL_OK")
</pallas_src>

<mosaic_0001>
module attributes {stable_mosaic.version = 11 : i64} {
  func.func @snn_tcy_kernel(%arg0: i32, %arg1: memref<1x2x2460xf32, #tpu.memory_space<vmem>>, %arg2: memref<10x2460xf32, #tpu.memory_space<vmem>>, %arg3: memref<1x10xf32, #tpu.memory_space<vmem>>, %arg4: memref<1x2x10xf32, #tpu.memory_space<vmem>>) attributes {dimension_semantics = [#tpu.dimension_semantics<parallel>], iteration_bounds = array<i64: 4>, scalar_prefetch = 0 : i64, scratch_operands = 0 : i64, tpu.core_type = #tpu.core_type<tc>, window_params = [{transform_indices = @transform_0, window_bounds = array<i64: 1, 2, 2460>}, {pipeline_mode = #tpu.pipeline_mode<synchronous>, transform_indices = @transform_1, window_bounds = array<i64: 10, 2460>}, {pipeline_mode = #tpu.pipeline_mode<synchronous>, transform_indices = @transform_2, window_bounds = array<i64: 1, 10>}, {transform_indices = @transform_3, window_bounds = array<i64: 1, 2, 10>}]} {
    %c0 = arith.constant 0 : index
    %c0_0 = arith.constant 0 : index
    %c0_1 = arith.constant 0 : index
    %0 = vector.load %arg1[%c0, %c0_0, %c0_1] : memref<1x2x2460xf32, #tpu.memory_space<vmem>>, vector<1x2x2460xf32>
    %1 = vector.shape_cast %0 : vector<1x2x2460xf32> to vector<2x2460xf32>
    %cst = arith.constant 9.99999997E-7 : f32
    %2 = vector.broadcast %cst : f32 to vector<2x2460xf32>
    %3 = arith.addf %1, %2 : vector<2x2460xf32>
    %4 = math.log %3 : vector<2x2460xf32>
    %5 = vector.shape_cast %4 : vector<2x2460xf32> to vector<1x2x2460xf32>
    %cst_2 = arith.constant dense<0.000000e+00> : vector<1xf32>
    %6 = vector.multi_reduction <add>, %5, %cst_2 [1, 2] : vector<1x2x2460xf32> to vector<1xf32>
    %7 = vector.shape_cast %6 : vector<1xf32> to vector<1x1x1xf32>
    %8 = vector.extract %7[0, 0, 0] : f32 from vector<1x1x1xf32>
    %cst_3 = arith.constant 4.920000e+03 : f32
    %9 = arith.divf %8, %cst_3 : f32
    %10 = vector.broadcast %9 : f32 to vector<2x2460xf32>
    %11 = arith.subf %4, %10 : vector<2x2460xf32>
    %12 = arith.mulf %11, %11 : vector<2x2460xf32>
    %13 = vector.shape_cast %12 : vector<2x2460xf32> to vector<1x2x2460xf32>
    %cst_4 = arith.constant dense<0.000000e+00> : vector<1xf32>
    %14 = vector.multi_reduction <add>, %13, %cst_4 [1, 2] : vector<1x2x2460xf32> to vector<1xf32>
    %15 = vector.shape_cast %14 : vector<1xf32> to vector<1x1x1xf32>
    %16 = vector.extract %15[0, 0, 0] : f32 from vector<1x1x1xf32>
    %cst_5 = arith.constant 4.919000e+03 : f32
    %17 = arith.divf %16, %cst_5 : f32
    %18 = math.sqrt %17 : f32
    %cst_6 = arith.constant 1.000000e+00 : f32
    %19 = arith.mulf %cst_6, %18 : f32
    %c0_7 = arith.constant 0 : index
    %c0_8 = arith.constant 0 : index
    %20 = vector.load %arg2[%c0_7, %c0_8] : memref<10x2460xf32, #tpu.memory_space<vmem>>, vector<10x2460xf32>
    %c0_9 = arith.constant 0 : index
    %c0_10 = arith.constant 0 : index
    %21 = vector.load %arg3[%c0_9, %c0_10] : memref<1x10xf32, #tpu.memory_space<vmem>>, vector<1x10xf32>
    %22 = vector.extract_strided_slice %11 {offsets = [0, 0], sizes = [1, 2460], strides = [1, 1]} : vector<2x2460xf32> to vector<1x2460xf32>
    %23 = vector.broadcast %19 : f32 to vector<1x2460xf32>
    %24 = arith.cmpf ogt, %22, %23 : vector<1x2460xf32>
    %cst_11 = arith.constant 0.000000e+00 : f32
    %25 = vector.shape_cast %24 : vector<1x2460xi1> to vector<1x2460xi1>
    %26 = vector.broadcast %25 : vector<1x2460xi1> to vector<10x2460xi1>
    %27 = vector.broadcast %cst_11 : f32 to vector<10x2460xf32>
    %28 = arith.select %26, %20, %27 : vector<10x2460xi1>, vector<10x2460xf32>
    %cst_12 = arith.constant dense<0.000000e+00> : vector<10xf32>
    %29 = vector.multi_reduction <add>, %28, %cst_12 [1] : vector<10x2460xf32> to vector<10xf32>
    %30 = vector.shape_cast %29 : vector<10xf32> to vector<1x10xf32>
    %31 = arith.addf %30, %21 : vector<1x10xf32>
    %32 = vector.shape_cast %31 : vector<1x10xf32> to vector<1x1x10xf32>
    %cst_13 = arith.constant dense<0xFF800000> : vector<1xf32>
    %33 = vector.multi_reduction <maximumf>, %32, %cst_13 [1, 2] : vector<1x1x10xf32> to vector<1xf32>
    %34 = vector.shape_cast %33 : vector<1xf32> to vector<1x1x1xf32>
    %35 = vector.extract %34[0, 0, 0] : f32 from vector<1x1x1xf32>
    %36 = vector.broadcast %35 : f32 to vector<1x10xf32>
    %37 = arith.subf %31, %36 : vector<1x10xf32>
    %38 = math.exp %37 : vector<1x10xf32>
    %39 = vector.shape_cast %38 : vector<1x10xf32> to vector<1x1x10xf32>
    %cst_14 = arith.constant dense<0.000000e+00> : vector<1xf32>
    %40 = vector.multi_reduction <add>, %39, %cst_14 [1, 2] : vector<1x1x10xf32> to vector<1xf32>
    %41 = vector.shape_cast %40 : vector<1xf32> to vector<1x1x1xf32>
    %42 = vector.extract %41[0, 0, 0] : f32 from vector<1x1x1xf32>
    %43 = vector.broadcast %42 : f32 to vector<1x10xf32>
    %44 = arith.divf %38, %43 : vector<1x10xf32>
    %c0_15 = arith.constant 0 : index
    %c0_16 = arith.constant 0 : index
    %c0_17 = arith.constant 0 : index
    %45 = vector.load %arg4[%c0_15, %c0_16, %c0_17] : memref<1x2x10xf32, #tpu.memory_space<vmem>>, vector<1x1x10xf32>
    %46 = vector.shape_cast %45 : vector<1x1x10xf32> to vector<1x10xf32>
    %47 = vector.shape_cast %44 : vector<1x10xf32> to vector<1x1x10xf32>
    tpu.vector_store %arg4[%c0_15, %c0_16, %c0_17], %47 {strides = array<i32>} : memref<1x2x10xf32, #tpu.memory_space<vmem>>, vector<1x1x10xf32>,
    %48 = vector.extract_strided_slice %11 {offsets = [1, 0], sizes = [1, 2460], strides = [1, 1]} : vector<2x2460xf32> to vector<1x2460xf32>
    %49 = vector.broadcast %19 : f32 to vector<1x2460xf32>
    %50 = arith.cmpf ogt, %48, %49 : vector<1x2460xf32>
    %cst_18 = arith.constant 0.000000e+00 : f32
    %51 = vector.shape_cast %50 : vector<1x2460xi1> to vector<1x2460xi1>
    %52 = vector.broadcast %51 : vector<1x2460xi1> to vector<10x2460xi1>
    %53 = vector.broadcast %cst_18 : f32 to vector<10x2460xf32>
    %54 = arith.select %52, %20, %53 : vector<10x2460xi1>, vector<10x2460xf32>
    %cst_19 = arith.constant dense<0.000000e+00> : vector<10xf32>
    %55 = vector.multi_reduction <add>, %54, %cst_19 [1] : vector<10x2460xf32> to vector<10xf32>
    %56 = vector.shape_cast %55 : vector<10xf32> to vector<1x10xf32>
    %57 = arith.addf %56, %21 : vector<1x10xf32>
    %58 = vector.shape_cast %57 : vector<1x10xf32> to vector<1x1x10xf32>
    %cst_20 = arith.constant dense<0xFF800000> : vector<1xf32>
    %59 = vector.multi_reduction <maximumf>, %58, %cst_20 [1, 2] : vector<1x1x10xf32> to vector<1xf32>
    %60 = vector.shape_cast %59 : vector<1xf32> to vector<1x1x1xf32>
    %61 = vector.extract %60[0, 0, 0] : f32 from vector<1x1x1xf32>
    %62 = vector.broadcast %61 : f32 to vector<1x10xf32>
    %63 = arith.subf %57, %62 : vector<1x10xf32>
    %64 = math.exp %63 : vector<1x10xf32>
    %65 = vector.shape_cast %64 : vector<1x10xf32> to vector<1x1x10xf32>
    %cst_21 = arith.constant dense<0.000000e+00> : vector<1xf32>
    %66 = vector.multi_reduction <add>, %65, %cst_21 [1, 2] : vector<1x1x10xf32> to vector<1xf32>
    %67 = vector.shape_cast %66 : vector<1xf32> to vector<1x1x1xf32>
    %68 = vector.extract %67[0, 0, 0] : f32 from vector<1x1x1xf32>
    %69 = vector.broadcast %68 : f32 to vector<1x10xf32>
    %70 = arith.divf %64, %69 : vector<1x10xf32>
    %c0_22 = arith.constant 0 : index
    %c1 = arith.constant 1 : index
    %c0_23 = arith.constant 0 : index
    %71 = vector.load %arg4[%c0_22, %c1, %c0_23] : memref<1x2x10xf32, #tpu.memory_space<vmem>>, vector<1x1x10xf32>
    %72 = vector.shape_cast %71 : vector<1x1x10xf32> to vector<1x10xf32>
    %73 = vector.shape_cast %70 : vector<1x10xf32> to vector<1x1x10xf32>
    tpu.vector_store %arg4[%c0_22, %c1, %c0_23], %73 {strides = array<i32>} : memref<1x2x10xf32, #tpu.memory_space<vmem>>, vector<1x1x10xf32>,
    return
  }
  func.func @transform_0(%arg0: i32) -> (i32, i32, i32) {
    %c0_i32 = arith.constant 0 : i32
    %c0_i32_0 = arith.constant 0 : i32
    %c0_i32_1 = arith.constant 0 : i32
    return %arg0, %c0_i32, %c0_i32_0 : i32, i32, i32
  }
  func.func @transform_1(%arg0: i32) -> (i32, i32) {
    %c0_i32 = arith.constant 0 : i32
    %c0_i32_0 = arith.constant 0 : i32
    %c0_i32_1 = arith.constant 0 : i32
    return %c0_i32, %c0_i32_0 : i32, i32
  }
  func.func @transform_2(%arg0: i32) -> (i32, i32) {
    %c0_i32 = arith.constant 0 : i32
    %c0_i32_0 = arith.constant 0 : i32
    %c0_i32_1 = arith.constant 0 : i32
    return %c0_i32, %c0_i32_0 : i32, i32
  }
  func.func @transform_3(%arg0: i32) -> (i32, i32, i32) {
    %c0_i32 = arith.constant 0 : i32
    %c0_i32_0 = arith.constant 0 : i32
    %c0_i32_1 = arith.constant 0 : i32
    return %arg0, %c0_i32, %c0_i32_0 : i32, i32, i32
  }
}

</mosaic_0001>

<llo_original>
// kernel: tpu_custom_call.1
$region0: #{tpu_custom_call.1}
  #allocation0 [shape = 'u32[]', space=smem, size = 0x4, offset = 0x4, fixed_abs, tag = 'smem constant byte address 0x4 - core index']
  #allocation1 [shape = 'u32[144,128]{1,0:T(1,128)}', space=vmem, size = 0x12000, scoped, tag = 'internal scratch']
  %s0 = inlined_call_operand.hbm [shape: f32[4,2,2460], index: 0, kind: input, shape index: {}]
  %s1 = inlined_call_operand.hbm [shape: f32[10,2460], index: 1, kind: input, shape index: {}]
  %s2 = inlined_call_operand.vmem [shape: f32[1,10], index: 2, kind: input, shape index: {}]
  %s3 = inlined_call_operand.hbm [shape: f32[4,2,10], index: 3, kind: output, shape index: {}]
  %s4 = sld [smem:[#allocation0]]
  $region53: #{tpu_custom_call.1} parent=0
    _
  %s6 = ssub.s32 1, %s4
  %s7 = scalar_select 0, %s6, %s4
  $region1: #{tpu_custom_call.1} parent=0
    #allocation2 [shape = 'u8[40960]{0}', space=vmem, size = 0xa000, scoped, tag = 'input window, operand 0']
    #allocation3 [shape = 's32[2]{0}', space=sflag, size = 0x8, scoped, tag = 'scoped memory for tpu_custom_call.1']
    #allocation4 [shape = 's32[2]{0}', space=sflag, size = 0x8, scoped, tag = 'scoped memory for tpu_custom_call.1']
    #allocation5 [shape = 'u8[163840]{0}', space=vmem, size = 0x28000, scoped, tag = 'input window, operand 1, single buffered']
    #allocation6 [shape = 's32[1]{0}', space=sflag, size = 0x4, scoped, tag = 'scoped memory for tpu_custom_call.1']
    #allocation7 [shape = 'u8[2048]{0}', space=vmem, size = 0x800, scoped, tag = 'output window, operand 0']
    %8 = vsyncpa [#allocation3], 0
    %s9 = scalar_lea.sflag [#allocation3], 1
    %10 = vsyncpa %s9, 0
    %11 = vsyncpa [#allocation6], 0
    %12 = vsyncpa [#allocation4], 0
    %s13 = scalar_lea.sflag [#allocation4], 1
    %14 = vsyncpa %s13, 0
    loop: start=0, step=1, limit=6
    $region2: #{tpu_custom_call.1} parent=1 // loop_pre_header
      _
    $region3: #{tpu_custom_call.1} parent=1 // loop_header
      %s16 = sphi 0, %s20
      %p17 = scmp.ge.s32.totalorder %s16, 6
      %s26 = sphi 0, %s28
      %s29 = sphi 0, %s26
      %s30 = sphi 0, %s29
      %s46 = sphi 0, %s30
      %s50 = sphi 0, %s50
      %s52 = sphi 0, %s50
      %s53 = sphi 0, %s52
      %s67 = sphi 0, %s53
      %s71 = sphi 0, %s71
      %s73 = sphi 0, %s71
      %s74 = sphi 0, %s73
      %s88 = sphi 0, %s74
      %s94 = sphi 0, %s96
      %s97 = sphi 0, %s94
      %s98 = sphi 0, %s97
      %s114 = sphi 0, %s98
    $region4: #{tpu_custom_call.1} parent=1 // loop_header_branch
      %19 = sbr.rel (%p17) target = $region8
    $region5: #{tpu_custom_call.1} parent=1 // loop_body
      %s21 = ssub.s32 %s16, 1
      %s22 = ssub.s32 %s16, 2
      %s23 = sadd.s32 %s16, 1
      %s24 = ssub.s32 %s16, %s23
      %p25 = scmp.eq.s32.totalorder %s24, 0
      %s27 = sadd.s32 %s26, 1
      %s28 = scalar_select %p25, %s26, %s27
      %p31 = pneg %p25
      %p32 = scmp.eq.s32.totalorder %s16, 3
      %p33 = por %p31, %p32
      %p34 = scmp.ne.s32.totalorder %s26, %s29
      %p35 = scmp.eq.s32.totalorder %s16, 0
      %p36 = por %p34, %p35
      %p37 = scmp.ne.s32.totalorder %s26, %s29
      %p38 = scmp.eq.s32.totalorder %s21, 3
      %p39 = por %p37, %p38
      %p40 = scmp.ne.s32.totalorder %s29, %s30
      %p41 = scmp.eq.s32.totalorder %s21, 0
      %p42 = por %p40, %p41
      %p43 = scmp.ne.s32.totalorder %s29, %s30
      %p44 = scmp.eq.s32.totalorder %s22, 3
      %p45 = por %p43, %p44
      %p47 = scmp.ne.s32.totalorder %s30, %s46
      %p48 = scmp.eq.s32.totalorder %s22, 0
      %p49 = por %p47, %p48
      %s51 = sadd.s32 %s50, 1
      %p54 = scmp.eq.s32.totalorder %s16, 3
      %p55 = scmp.ne.s32.totalorder %s50, %s52
      %p56 = scmp.eq.s32.totalorder %s16, 0
      %p57 = por %p55, %p56
      %p58 = scmp.ne.s32.totalorder %s50, %s52
      %p59 = scmp.eq.s32.totalorder %s21, 3
      %p60 = por %p58, %p59
      %p61 = scmp.ne.s32.totalorder %s52, %s53
      %p62 = scmp.eq.s32.totalorder %s21, 0
      %p63 = por %p61, %p62
      %p64 = scmp.ne.s32.totalorder %s52, %s53
      %p65 = scmp.eq.s32.totalorder %s22, 3
      %p66 = por %p64, %p65
      %p68 = scmp.ne.s32.totalorder %s53, %s67
      %p69 = scmp.eq.s32.totalorder %s22, 0
      %p70 = por %p68, %p69
      %s72 = sadd.s32 %s71, 1
      %p75 = scmp.eq.s32.totalorder %s16, 3
      %p76 = scmp.ne.s32.totalorder %s71, %s73
      %p77 = scmp.eq.s32.totalorder %s16, 0
      %p78 = por %p76, %p77
      %p79 = scmp.ne.s32.totalorder %s71, %s73
      %p80 = scmp.eq.s32.totalorder %s21, 3
      %p81 = por %p79, %p80
      %p82 = scmp.ne.s32.totalorder %s73, %s74
      %p83 = scmp.eq.s32.totalorder %s21, 0
      %p84 = por %p82, %p83
      %p85 = scmp.ne.s32.totalorder %s73, %s74
      %p86 = scmp.eq.s32.totalorder %s22, 3
      %p87 = por %p85, %p86
      %p89 = scmp.ne.s32.totalorder %s74, %s88
      %p90 = scmp.eq.s32.totalorder %s22, 0
      %p91 = por %p89, %p90
      %s92 = ssub.s32 %s16, %s23
      %p93 = scmp.eq.s32.totalorder %s92, 0
      %s95 = sadd.s32 %s94, 1
      %s96 = scalar_select %p93, %s94, %s95
      %p99 = pneg %p93
      %p100 = scmp.eq.s32.totalorder %s16, 3
      %p101 = por %p99, %p100
      %p102 = scmp.ne.s32.totalorder %s94, %s97
      %p103 = scmp.eq.s32.totalorder %s16, 0
      %p104 = por %p102, %p103
      %p105 = scmp.ne.s32.totalorder %s94, %s97
      %p106 = scmp.eq.s32.totalorder %s21, 3
      %p107 = por %p105, %p106
      %p108 = scmp.ne.s32.totalorder %s97, %s98
      %p109 = scmp.eq.s32.totalorder %s21, 0
      %p110 = por %p108, %p109
      %p111 = scmp.ne.s32.totalorder %s97, %s98
      %p112 = scmp.eq.s32.totalorder %s22, 3
      %p113 = por %p111, %p112
      %p115 = scmp.ne.s32.totalorder %s98, %s114
      %p116 = scmp.eq.s32.totalorder %s22, 0
      %p117 = por %p115, %p116
      %p118 = scmp.le.s32.totalorder 1, %s16
      %p119 = scmp.lt.s32.totalorder %s16, 5
      %p120 = pnand %p118, %p119
      %p121 = pneg %p120
      // Predicated region
      $region9: #{tpu_custom_call.1} parent=5 // pred_check
        _
      $region10: #{tpu_custom_call.1} parent=5 // pred_check_branch
        %123 = sbr.rel (%p120) target = $region12
      $region11: #{tpu_custom_call.1} parent=5 // pred_region
        %s124 = ssub.s32 %s16, 1
        // Predicated region
        $region13: #{tpu_custom_call.1} parent=11 // pred_check
          %p125 = pneg %p63
        $region14: #{tpu_custom_call.1} parent=11 // pred_check_branch
          %127 = sbr.rel (%p125) target = $region16
        $region15: #{tpu_custom_call.1} parent=11 // pred_region
          %s129 = ssub.s32 5120, 5120
          %130 = vsyncadd [#allocation6], %s129
          %s131 = sshll.u32 [#allocation5], 4
          %s132 = int_to_ptr.vmem [resolvable:$true] %s131
          %137 = dma.hbm_to_vmem [thread:$0]  %s1, 5120, %s132, [#allocation6], 2560, 2560, 160
        $region16: #{tpu_custom_call.1} parent=11 // pred_fallthru
          _
        // Predicated region
        $region17: #{tpu_custom_call.1} parent=11 // pred_check
          %p138 = pneg %p84
        $region18: #{tpu_custom_call.1} parent=11 // pred_check_branch
          %140 = sbr.rel (%p138) target = $region20
        $region19: #{tpu_custom_call.1} parent=11 // pred_region
          _
        $region20: #{tpu_custom_call.1} parent=11 // pred_fallthru
          _
      $region12: #{tpu_custom_call.1} parent=5 // pred_fallthru
        _
      %p141 = scmp.lt.s32.totalorder %s16, 4
      // Predicated region
      $region21: #{tpu_custom_call.1} parent=5 // pred_check
        %p142 = pneg %p141
      $region22: #{tpu_custom_call.1} parent=5 // pred_check_branch
        %144 = sbr.rel (%p142) target = $region24
      $region23: #{tpu_custom_call.1} parent=5 // pred_region
        // Predicated region
        $region25: #{tpu_custom_call.1} parent=23 // pred_check
          %p145 = pneg %p36
        $region26: #{tpu_custom_call.1} parent=23 // pred_check_branch
          %147 = sbr.rel (%p145) target = $region28
        $region27: #{tpu_custom_call.1} parent=23 // pred_region
          %s148 = sand.u32 %s26, 1
          %s149 = scalar_lea.sflag [#allocation3], %s148
          %s150 = sand.u32 %s26, 1
          %s151 = smul.addr %s150, 40
          %s152 = scalar_lea.vmem [#allocation2], %s151
          %s154 = ssub.s32 640, 640
          %155 = vsyncadd %s149, %s154
          %s156 = smul.addr %s16, 20
          %s157 = smul.addr %s156, 32
          %s158 = scalar_lea.hbm %s0, %s157
          %s160 = sshll.u32 %s152, 4
          %s161 = int_to_ptr.vmem [resolvable:$true] %s160
          %163 = dma.hbm_to_vmem [thread:$0]  %s158, 640, %s161, %s149
        $region28: #{tpu_custom_call.1} parent=23 // pred_fallthru
          _
      $region24: #{tpu_custom_call.1} parent=5 // pred_fallthru
        _
      %p164 = scmp.le.s32.totalorder 1, %s16
      %p165 = scmp.lt.s32.totalorder %s16, 5
      %p166 = pnand %p164, %p165
      %p167 = pneg %p166
      // Predicated region
      $region29: #{tpu_custom_call.1} parent=5 // pred_check
        _
      $region30: #{tpu_custom_call.1} parent=5 // pred_check_branch
        %169 = sbr.rel (%p166) target = $region32
      $region31: #{tpu_custom_call.1} parent=5 // pred_region
        %s170 = ssub.s32 %s16, 1
        %s171 = sand.u32 %s29, 1
        %s172 = scalar_lea.sflag [#allocation3], %s171
        %s173 = sand.u32 %s29, 1
        %s174 = smul.addr %s173, 40
        %s175 = scalar_lea.vmem [#allocation2], %s174
        // Predicated region
        $region33: #{tpu_custom_call.1} parent=31 // pred_check
          %p176 = pneg %p42
        $region34: #{tpu_custom_call.1} parent=31 // pred_check_branch
          %178 = sbr.rel (%p176) target = $region36
        $region35: #{tpu_custom_call.1} parent=31 // pred_region
          %179 = dma.done %s172, 640
        $region36: #{tpu_custom_call.1} parent=31 // pred_fallthru
          _
        // Predicated region
        $region37: #{tpu_custom_call.1} parent=31 // pred_check
          %p180 = pneg %p63
        $region38: #{tpu_custom_call.1} parent=31 // pred_check_branch
          %182 = sbr.rel (%p180) target = $region40
        $region39: #{tpu_custom_call.1} parent=31 // pred_region
          %183 = dma.done [#allocation6], 5120
        $region40: #{tpu_custom_call.1} parent=31 // pred_fallthru
          _
        %s184 = sand.u32 %s29, 1
        %s185 = scalar_lea.sflag [#allocation3], %s184
        %s186 = sand.u32 %s29, 1
        %s187 = smul.addr %s186, 40
        %s188 = scalar_lea.vmem [#allocation2], %s187
        %p189 = pneg %p42
        %p190 = pneg %p39
        %p191 = pneg %p63
        %p192 = pneg %p60
        %p193 = pneg %p84
        %p194 = pneg %p81
        %p195 = pneg %p110
        %p196 = pneg %p107
        %s197 = sand.u32 %s97, 1
        %s198 = scalar_lea.sflag [#allocation4], %s197
        %s199 = sand.u32 %s97, 1
        %s200 = smul.addr %s199, 2
        %s201 = scalar_lea.vmem [#allocation7], %s200
        %v202 = vld [vmem:[%s175] sm:$0xff]
        %v203 = vld [vmem:[%s175 + $0x8] sm:$0xff]
        %v204 = vld [vmem:[%s175 + $0x10] sm:$0xff]
        %v205 = vld [vmem:[%s175 + $0x18] sm:$0xff]
        %v206 = vld [vmem:[%s175 + $0x20] sm:$0xff]
        %v207 = vadd.f32 %v202, 1e-06
        %v208 = vadd.f32 %v203, 1e-06
        %v209 = vadd.f32 %v204, 1e-06
        %v210 = vadd.f32 %v205, 1e-06
        %v211 = vadd.f32 %v206, 1e-06
        %v212 = vlog2.pop %v207
        %v213 = vmul.f32 %v212, 0.6931472
        %v214 = vlog2.pop %v208
        %v215 = vmul.f32 %v214, 0.6931472
        %v216 = vlog2.pop %v209
        %v217 = vmul.f32 %v216, 0.6931472
        %v218 = vlog2.pop %v210
        %v219 = vmul.f32 %v218, 0.6931472
        %v220 = vlog2.pop %v211
        %v221 = vmul.f32 %v220, 0.6931472
        %v227 = vcombine.high %v213, %v213
        %v229 = vunpack.c.l.s4 1983009808
        %v230 = vunpack.c.0.s8 %v229
        %v231 = vlaneseq
        %v232 = vshrl.u32 %v231, 7
        %v233 = vsub.s32 %v230, %v232
        %v234 = vrot.slane %v213, %v233
        %v236 = vunpack.c.l.s4 1983009808
        %v237 = vunpack.c.0.s8 %v236
        %v238 = vlaneseq
        %v239 = vshrl.u32 %v238, 7
        %v240 = vsub.s32 %v237, %v239
        %v241 = vrot.slane %v227, %v240
        %v242 = vcombine.high %v234, %v234
        %v243 = vcombine.high %v241, %v241
        %v244 = vcombine.high %v215, %v215
        %v246 = vunpack.c.l.s4 1983009808
        %v247 = vunpack.c.0.s8 %v246
        %v248 = vlaneseq
        %v249 = vshrl.u32 %v248, 7
        %v250 = vsub.s32 %v247, %v249
        %v251 = vrot.slane %v215, %v250
        %v253 = vunpack.c.l.s4 1983009808
        %v254 = vunpack.c.0.s8 %v253
        %v255 = vlaneseq
        %v256 = vshrl.u32 %v255, 7
        %v257 = vsub.s32 %v254, %v256
        %v258 = vrot.slane %v244, %v257
        %v259 = vcombine.high %v251, %v251
        %v260 = vcombine.high %v258, %v258
        %v261 = vcombine.high %v217, %v217
        %v263 = vunpack.c.l.s4 1983009808
        %v264 = vunpack.c.0.s8 %v263
        %v265 = vlaneseq
        %v266 = vshrl.u32 %v265, 7
        %v267 = vsub.s32 %v264, %v266
        %v268 = vrot.slane %v217, %v267
        %v270 = vunpack.c.l.s4 1983009808
        %v271 = vunpack.c.0.s8 %v270
        %v272 = vlaneseq
        %v273 = vshrl.u32 %v272, 7
        %v274 = vsub.s32 %v271, %v273
        %v275 = vrot.slane %v261, %v274
        %v276 = vcombine.high %v268, %v268
        %v277 = vcombine.high %v275, %v275
        %v278 = vcombine.high %v219, %v219
        %v280 = vunpack.c.l.s4 1983009808
        %v281 = vunpack.c.0.s8 %v280
        %v282 = vlaneseq
        %v283 = vshrl.u32 %v282, 7
        %v284 = vsub.s32 %v281, %v283
        %v285 = vrot.slane %v219, %v284
        %v287 = vunpack.c.l.s4 1983009808
        %v288 = vunpack.c.0.s8 %v287
        %v289 = vlaneseq
        %v290 = vshrl.u32 %v289, 7
        %v291 = vsub.s32 %v288, %v290
        %v292 = vrot.slane %v278, %v291
        %v293 = vcombine.high %v285, %v285
        %v294 = vcombine.high %v292, %v292
        %v295 = vcombine.high %v221, %v221
        %v297 = vunpack.c.l.s4 1983009808
        %v298 = vunpack.c.0.s8 %v297
        %v299 = vlaneseq
        %v300 = vshrl.u32 %v299, 7
        %v301 = vsub.s32 %v298, %v300
        %v302 = vrot.slane %v221, %v301
        %v304 = vunpack.c.l.s4 1983009808
        %v305 = vunpack.c.0.s8 %v304
        %v306 = vlaneseq
        %v307 = vshrl.u32 %v306, 7
        %v308 = vsub.s32 %v305, %v307
        %v309 = vrot.slane %v295, %v308
        %v310 = vcombine.high %v302, %v302
        %v311 = vcombine.high %v309, %v309
        %vm332 = vcmask 1041408
        %v333 = vsel %vm332, %v234, 0.0
        %v334 = vsel %vm332, %v242, 0.0
        %v335 = vadd.f32 %v333, %v334
        %v336 = vsel %vm332, %v241, 0.0
        %v337 = vadd.f32 %v335, %v336
        %v338 = vsel %vm332, %v243, 0.0
        %v339 = vadd.f32 %v337, %v338
        %v340 = vsel %vm332, %v251, 0.0
        %v341 = vadd.f32 %v339, %v340
        %v342 = vsel %vm332, %v259, 0.0
        %v343 = vadd.f32 %v341, %v342
        %v344 = vsel %vm332, %v258, 0.0
        %v345 = vadd.f32 %v343, %v344
        %v346 = vsel %vm332, %v260, 0.0
        %v347 = vadd.f32 %v345, %v346
        %v348 = vsel %vm332, %v268, 0.0
        %v349 = vadd.f32 %v347, %v348
        %v350 = vsel %vm332, %v276, 0.0
        %v351 = vadd.f32 %v349, %v350
        %v352 = vsel %vm332, %v275, 0.0
        %v353 = vadd.f32 %v351, %v352
        %v354 = vsel %vm332, %v277, 0.0
        %v355 = vadd.f32 %v353, %v354
        %v356 = vsel %vm332, %v285, 0.0
        %v357 = vadd.f32 %v355, %v356
        %v358 = vsel %vm332, %v293, 0.0
        %v359 = vadd.f32 %v357, %v358
        %v360 = vsel %vm332, %v292, 0.0
        %v361 = vadd.f32 %v359, %v360
        %v362 = vsel %vm332, %v294, 0.0
        %v363 = vadd.f32 %v361, %v362
        %v364 = vsel %vm332, %v302, 0.0
        %v365 = vadd.f32 %v363, %v364
        %v366 = vsel %vm332, %v310, 0.0
        %v367 = vadd.f32 %v365, %v366
        %v368 = vsel %vm332, %v309, 0.0
        %v369 = vadd.f32 %v367, %v368
        %vm370 = vcmask 222208
        %v371 = vsel %vm370, %v311, 0.0
        %v372 = vadd.f32 %v369, %v371
        %373 = vadd.xlane.f32.xlu0 %v372
        %v374 = vpop.xlane.xlu0 %373
        %v375 = vrot.slane %v374, 4
        %v376 = vadd.f32 %v374, %v375
        %v377 = vrot.slane %v376, 2
        %v378 = vadd.f32 %v376, %v377
        %v379 = vrot.slane %v378, 1
        %v380 = vadd.f32 %v378, %v379
        %s381 = vtos %v380
        %v382 = vrcp.pop 4920.0
        %s383 = vtos %v382
        %s384 = smul.f32 %s381, %s383
        %v385 = vstv %s384
        %v386 = vsub.f32 %v213, %v385
        %v387 = vsub.f32 %v215, %v385
        %v388 = vsub.f32 %v217, %v385
        %v389 = vsub.f32 %v219, %v385
        %v390 = vsub.f32 %v221, %v385
        %v391 = vmul.f32 %v386, %v386
        %v392 = vmul.f32 %v387, %v387
        %v393 = vmul.f32 %v388, %v388
        %v394 = vmul.f32 %v389, %v389
        %v395 = vmul.f32 %v390, %v390
        %v401 = vcombine.high %v391, %v391
        %v403 = vunpack.c.l.s4 1983009808
        %v404 = vunpack.c.0.s8 %v403
        %v405 = vlaneseq
        %v406 = vshrl.u32 %v405, 7
        %v407 = vsub.s32 %v404, %v406
        %v408 = vrot.slane %v391, %v407
        %v410 = vunpack.c.l.s4 1983009808
        %v411 = vunpack.c.0.s8 %v410
        %v412 = vlaneseq
        %v413 = vshrl.u32 %v412, 7
        %v414 = vsub.s32 %v411, %v413
        %v415 = vrot.slane %v401, %v414
        %v416 = vcombine.high %v408, %v408
        %v417 = vcombine.high %v415, %v415
        %v418 = vcombine.high %v392, %v392
        %v420 = vunpack.c.l.s4 1983009808
        %v421 = vunpack.c.0.s8 %v420
        %v422 = vlaneseq
        %v423 = vshrl.u32 %v422, 7
        %v424 = vsub.s32 %v421, %v423
        %v425 = vrot.slane %v392, %v424
        %v427 = vunpack.c.l.s4 1983009808
        %v428 = vunpack.c.0.s8 %v427
        %v429 = vlaneseq
        %v430 = vshrl.u32 %v429, 7
        %v431 = vsub.s32 %v428, %v430
        %v432 = vrot.slane %v418, %v431
        %v433 = vcombine.high %v425, %v425
        %v434 = vcombine.high %v432, %v432
        %v435 = vcombine.high %v393, %v393
        %v437 = vunpack.c.l.s4 1983009808
        %v438 = vunpack.c.0.s8 %v437
        %v439 = vlaneseq
        %v440 = vshrl.u32 %v439, 7
        %v441 = vsub.s32 %v438, %v440
        %v442 = vrot.slane %v393, %v441
        %v444 = vunpack.c.l.s4 1983009808
        %v445 = vunpack.c.0.s8 %v444
        %v446 = vlaneseq
        %v447 = vshrl.u32 %v446, 7
        %v448 = vsub.s32 %v445, %v447
        %v449 = vrot.slane %v435, %v448
        %v450 = vcombine.high %v442, %v442
        %v451 = vcombine.high %v449, %v449
        %v452 = vcombine.high %v394, %v394
        %v454 = vunpack.c.l.s4 1983009808
        %v455 = vunpack.c.0.s8 %v454
        %v456 = vlaneseq
        %v457 = vshrl.u32 %v456, 7
        %v458 = vsub.s32 %v455, %v457
        %v459 = vrot.slane %v394, %v458
        %v461 = vunpack.c.l.s4 1983009808
        %v462 = vunpack.c.0.s8 %v461
        %v463 = vlaneseq
        %v464 = vshrl.u32 %v463, 7
        %v465 = vsub.s32 %v462, %v464
        %v466 = vrot.slane %v452, %v465
        %v467 = vcombine.high %v459, %v459
        %v468 = vcombine.high %v466, %v466
        %v469 = vcombine.high %v395, %v395
        %v471 = vunpack.c.l.s4 1983009808
        %v472 = vunpack.c.0.s8 %v471
        %v473 = vlaneseq
        %v474 = vshrl.u32 %v473, 7
        %v475 = vsub.s32 %v472, %v474
        %v476 = vrot.slane %v395, %v475
        %v478 = vunpack.c.l.s4 1983009808
        %v479 = vunpack.c.0.s8 %v478
        %v480 = vlaneseq
        %v481 = vshrl.u32 %v480, 7
        %v482 = vsub.s32 %v479, %v481
        %v483 = vrot.slane %v469, %v482
        %v484 = vcombine.high %v476, %v476
        %v485 = vcombine.high %v483, %v483
        %v506 = vsel %vm332, %v408, 0.0
        %v507 = vsel %vm332, %v416, 0.0
        %v508 = vadd.f32 %v506, %v507
        %v509 = vsel %vm332, %v415, 0.0
        %v510 = vadd.f32 %v508, %v509
        %v511 = vsel %vm332, %v417, 0.0
        %v512 = vadd.f32 %v510, %v511
        %v513 = vsel %vm332, %v425, 0.0
        %v514 = vadd.f32 %v512, %v513
        %v515 = vsel %vm332, %v433, 0.0
        %v516 = vadd.f32 %v514, %v515
        %v517 = vsel %vm332, %v432, 0.0
        %v518 = vadd.f32 %v516, %v517
        %v519 = vsel %vm332, %v434, 0.0
        %v520 = vadd.f32 %v518, %v519
        %v521 = vsel %vm332, %v442, 0.0
        %v522 = vadd.f32 %v520, %v521
        %v523 = vsel %vm332, %v450, 0.0
        %v524 = vadd.f32 %v522, %v523
        %v525 = vsel %vm332, %v449, 0.0
        %v526 = vadd.f32 %v524, %v525
        %v527 = vsel %vm332, %v451, 0.0
        %v528 = vadd.f32 %v526, %v527
        %v529 = vsel %vm332, %v459, 0.0
        %v530 = vadd.f32 %v528, %v529
        %v531 = vsel %vm332, %v467, 0.0
        %v532 = vadd.f32 %v530, %v531
        %v533 = vsel %vm332, %v466, 0.0
        %v534 = vadd.f32 %v532, %v533
        %v535 = vsel %vm332, %v468, 0.0
        %v536 = vadd.f32 %v534, %v535
        %v537 = vsel %vm332, %v476, 0.0
        %v538 = vadd.f32 %v536, %v537
        %v539 = vsel %vm332, %v484, 0.0
        %v540 = vadd.f32 %v538, %v539
        %v541 = vsel %vm332, %v483, 0.0
        %v542 = vadd.f32 %v540, %v541
        %v543 = vsel %vm370, %v485, 0.0
        %v544 = vadd.f32 %v542, %v543
        %545 = vadd.xlane.f32.xlu0 %v544
        %v546 = vpop.xlane.xlu0 %545
        %v547 = vrot.slane %v546, 4
        %v548 = vadd.f32 %v546, %v547
        %v549 = vrot.slane %v548, 2
        %v550 = vadd.f32 %v548, %v549
        %v551 = vrot.slane %v550, 1
        %v552 = vadd.f32 %v550, %v551
        %s553 = vtos %v552
        %v554 = vrcp.pop 4919.0
        %s555 = vtos %v554
        %s556 = smul.f32 %s553, %s555
        %v557 = vstv %s556
        %v558 = vrsqrt.pop %v557
        %v559 = vmul.f32 %v557, %v558
        %vm560 = vcmp.eq.f32.partialorder %v557, inf
        %v561 = vsel %vm560, %v557, %v559
        %vm562 = vcmp.eq.f32.partialorder %v557, 0.0
        %v563 = vand.u32 %v557, 2147483648
        %v564 = vsel %vm562, %v563, %v561
        %s565 = vtos %v564
        %v566 = vld [vmem:[#allocation5] sm:$0xff]
        %v567 = vld [vmem:[#allocation5 + $0x8] sm:$0xff]
        %v568 = vld [vmem:[#allocation5 + $0x10] sm:$0xff]
        %v569 = vld [vmem:[#allocation5 + $0x18] sm:$0xff]
        %v570 = vld [vmem:[#allocation5 + $0x20] sm:$0xff]
        %v571 = vld [vmem:[#allocation5 + $0x28] sm:$0xff]
        %v572 = vld [vmem:[#allocation5 + $0x30] sm:$0xff]
        %v573 = vld [vmem:[#allocation5 + $0x38] sm:$0xff]
        %v574 = vld [vmem:[#allocation5 + $0x40] sm:$0xff]
        %v575 = vld [vmem:[#allocation5 + $0x48] sm:$0xff]
        %v576 = vld [vmem:[#allocation5 + $0x50] sm:$0xff]
        %v577 = vld [vmem:[#allocation5 + $0x58] sm:$0xff]
        %v578 = vld [vmem:[#allocation5 + $0x60] sm:$0xff]
        %v579 = vld [vmem:[#allocation5 + $0x68] sm:$0xff]
        %v580 = vld [vmem:[#allocation5 + $0x70] sm:$0xff]
        %v581 = vld [vmem:[#allocation5 + $0x78] sm:$0xff]
        %v582 = vld [vmem:[#allocation5 + $0x80] sm:$0xff]
        %v583 = vld [vmem:[#allocation5 + $0x88] sm:$0xff]
        %v584 = vld [vmem:[#allocation5 + $0x90] sm:$0xff]
        %v585 = vld [vmem:[#allocation5 + $0x98] sm:$0xff]
        %v586 = vld [vmem:[#allocation5 + $0xa0] sm:$0x3]
        %v587 = vld [vmem:[#allocation5 + $0xa8] sm:$0x3]
        %v588 = vld [vmem:[#allocation5 + $0xb0] sm:$0x3]
        %v589 = vld [vmem:[#allocation5 + $0xb8] sm:$0x3]
        %v590 = vld [vmem:[#allocation5 + $0xc0] sm:$0x3]
        %v591 = vld [vmem:[#allocation5 + $0xc8] sm:$0x3]
        %v592 = vld [vmem:[#allocation5 + $0xd0] sm:$0x3]
        %v593 = vld [vmem:[#allocation5 + $0xd8] sm:$0x3]
        %v594 = vld [vmem:[#allocation5 + $0xe0] sm:$0x3]
        %v595 = vld [vmem:[#allocation5 + $0xe8] sm:$0x3]
        %v596 = vld [vmem:[#allocation5 + $0xf0] sm:$0x3]
        %v597 = vld [vmem:[#allocation5 + $0xf8] sm:$0x3]
        %v598 = vld [vmem:[#allocation5 + $0x100] sm:$0x3]
        %v599 = vld [vmem:[#allocation5 + $0x108] sm:$0x3]
        %v600 = vld [vmem:[#allocation5 + $0x110] sm:$0x3]
        %v601 = vld [vmem:[#allocation5 + $0x118] sm:$0x3]
        %v602 = vld [vmem:[#allocation5 + $0x120] sm:$0x3]
        %v603 = vld [vmem:[#allocation5 + $0x128] sm:$0x3]
        %v604 = vld [vmem:[#allocation5 + $0x130] sm:$0x3]
        %v605 = vld [vmem:[#allocation5 + $0x138] sm:$0x3]
        %v606 = vld [vmem:[%s2] sm:$0x1]
        %v607 = vstv %s565
        %vm608 = vcmp.gt.f32.partialorder %v386, %v607
        %vm609 = vcmp.gt.f32.partialorder %v387, %v607
        %vm610 = vcmp.gt.f32.partialorder %v388, %v607
        %vm611 = vcmp.gt.f32.partialorder %v389, %v607
        %vm612 = vcmp.gt.f32.partialorder %v390, %v607
        %v613 = vsel %vm608, 1, 0
        %v614 = vsel %vm609, 1, 0
        %v615 = vsel %vm610, 1, 0
        %v616 = vsel %vm611, 1, 0
        %v617 = vsel %vm612, 1, 0
        %v618 = vlaneseq
        %v619 = vshrl.u32 %v618, 7
        %v620 = vsub.s32 0, %v619
        %v621 = vrot.slane %v613, %v620
        %v622 = vlaneseq
        %v623 = vshrl.u32 %v622, 7
        %v624 = vsub.s32 2, %v623
        %v625 = vrot.slane %v613, %v624
        %v626 = vlaneseq
        %v627 = vshrl.u32 %v626, 7
        %v628 = vsub.s32 4, %v627
        %v629 = vrot.slane %v613, %v628
        %v630 = vlaneseq
        %v631 = vshrl.u32 %v630, 7
        %v632 = vsub.s32 6, %v631
        %v633 = vrot.slane %v613, %v632
        %v634 = vlaneseq
        %v635 = vshrl.u32 %v634, 7
        %v636 = vsub.s32 0, %v635
        %v637 = vrot.slane %v614, %v636
        %v638 = vlaneseq
        %v639 = vshrl.u32 %v638, 7
        %v640 = vsub.s32 2, %v639
        %v641 = vrot.slane %v614, %v640
        %v642 = vlaneseq
        %v643 = vshrl.u32 %v642, 7
        %v644 = vsub.s32 4, %v643
        %v645 = vrot.slane %v614, %v644
        %v646 = vlaneseq
        %v647 = vshrl.u32 %v646, 7
        %v648 = vsub.s32 6, %v647
        %v649 = vrot.slane %v614, %v648
        %v650 = vlaneseq
        %v651 = vshrl.u32 %v650, 7
        %v652 = vsub.s32 0, %v651
        %v653 = vrot.slane %v615, %v652
        %v654 = vlaneseq
        %v655 = vshrl.u32 %v654, 7
        %v656 = vsub.s32 2, %v655
        %v657 = vrot.slane %v615, %v656
        %v658 = vlaneseq
        %v659 = vshrl.u32 %v658, 7
        %v660 = vsub.s32 4, %v659
        %v661 = vrot.slane %v615, %v660
        %v662 = vlaneseq
        %v663 = vshrl.u32 %v662, 7
        %v664 = vsub.s32 6, %v663
        %v665 = vrot.slane %v615, %v664
        %v666 = vlaneseq
        %v667 = vshrl.u32 %v666, 7
        %v668 = vsub.s32 0, %v667
        %v669 = vrot.slane %v616, %v668
        %v670 = vlaneseq
        %v671 = vshrl.u32 %v670, 7
        %v672 = vsub.s32 2, %v671
        %v673 = vrot.slane %v616, %v672
        %v674 = vlaneseq
        %v675 = vshrl.u32 %v674, 7
        %v676 = vsub.s32 4, %v675
        %v677 = vrot.slane %v616, %v676
        %v678 = vlaneseq
        %v679 = vshrl.u32 %v678, 7
        %v680 = vsub.s32 6, %v679
        %v681 = vrot.slane %v616, %v680
        %v682 = vlaneseq
        %v683 = vshrl.u32 %v682, 7
        %v684 = vsub.s32 0, %v683
        %v685 = vrot.slane %v617, %v684
        %v686 = vlaneseq
        %v687 = vshrl.u32 %v686, 7
        %v688 = vsub.s32 2, %v687
        %v689 = vrot.slane %v617, %v688
        %v690 = vlaneseq
        %v691 = vshrl.u32 %v690, 7
        %v692 = vsub.s32 4, %v691
        %v693 = vrot.slane %v617, %v692
        %v694 = vlaneseq
        %v695 = vshrl.u32 %v694, 7
        %v696 = vsub.s32 6, %v695
        %v697 = vrot.slane %v617, %v696
        %v698 = vlaneseq
        %v699 = vshrl.u32 %v698, 7
        %v700 = vsub.s32 0, %v699
        %v701 = vrot.slane %v621, %v700
        %v702 = vlaneseq
        %v703 = vshrl.u32 %v702, 7
        %v704 = vsub.s32 0, %v703
        %v705 = vrot.slane %v625, %v704
        %v706 = vlaneseq
        %v707 = vshrl.u32 %v706, 7
        %v708 = vsub.s32 0, %v707
        %v709 = vrot.slane %v629, %v708
        %v710 = vlaneseq
        %v711 = vshrl.u32 %v710, 7
        %v712 = vsub.s32 0, %v711
        %v713 = vrot.slane %v633, %v712
        %v714 = vlaneseq
        %v715 = vshrl.u32 %v714, 7
        %v716 = vsub.s32 0, %v715
        %v717 = vrot.slane %v637, %v716
        %v718 = vlaneseq
        %v719 = vshrl.u32 %v718, 7
        %v720 = vsub.s32 0, %v719
        %v721 = vrot.slane %v641, %v720
        %v722 = vlaneseq
        %v723 = vshrl.u32 %v722, 7
        %v724 = vsub.s32 0, %v723
        %v725 = vrot.slane %v645, %v724
        %v726 = vlaneseq
        %v727 = vshrl.u32 %v726, 7
        %v728 = vsub.s32 0, %v727
        %v729 = vrot.slane %v649, %v728
        %v730 = vlaneseq
        %v731 = vshrl.u32 %v730, 7
        %v732 = vsub.s32 0, %v731
        %v733 = vrot.slane %v653, %v732
        %v734 = vlaneseq
        %v735 = vshrl.u32 %v734, 7
        %v736 = vsub.s32 0, %v735
        %v737 = vrot.slane %v657, %v736
        %v738 = vlaneseq
        %v739 = vshrl.u32 %v738, 7
        %v740 = vsub.s32 0, %v739
        %v741 = vrot.slane %v661, %v740
        %v742 = vlaneseq
        %v743 = vshrl.u32 %v742, 7
        %v744 = vsub.s32 0, %v743
        %v745 = vrot.slane %v665, %v744
        %v746 = vlaneseq
        %v747 = vshrl.u32 %v746, 7
        %v748 = vsub.s32 0, %v747
        %v749 = vrot.slane %v669, %v748
        %v750 = vlaneseq
        %v751 = vshrl.u32 %v750, 7
        %v752 = vsub.s32 0, %v751
        %v753 = vrot.slane %v673, %v752
        %v754 = vlaneseq
        %v755 = vshrl.u32 %v754, 7
        %v756 = vsub.s32 0, %v755
        %v757 = vrot.slane %v677, %v756
        %v758 = vlaneseq
        %v759 = vshrl.u32 %v758, 7
        %v760 = vsub.s32 0, %v759
        %v761 = vrot.slane %v681, %v760
        %v762 = vlaneseq
        %v763 = vshrl.u32 %v762, 7
        %v764 = vsub.s32 0, %v763
        %v765 = vrot.slane %v685, %v764
        %v766 = vlaneseq
        %v767 = vshrl.u32 %v766, 7
        %v768 = vsub.s32 0, %v767
        %v769 = vrot.slane %v689, %v768
        %v770 = vlaneseq
        %v771 = vshrl.u32 %v770, 7
        %v772 = vsub.s32 0, %v771
        %v773 = vrot.slane %v693, %v772
        %v774 = vlaneseq
        %v775 = vshrl.u32 %v774, 7
        %v776 = vsub.s32 0, %v775
        %v777 = vrot.slane %v697, %v776
        %vm778 = vcmp.eq.s32.totalorder %v701, 1
        %vm779 = vcmp.eq.s32.totalorder %v705, 1
        %vm780 = vcmp.eq.s32.totalorder %v709, 1
        %vm781 = vcmp.eq.s32.totalorder %v713, 1
        %vm782 = vcmp.eq.s32.totalorder %v717, 1
        %vm783 = vcmp.eq.s32.totalorder %v721, 1
        %vm784 = vcmp.eq.s32.totalorder %v725, 1
        %vm785 = vcmp.eq.s32.totalorder %v729, 1
        %vm786 = vcmp.eq.s32.totalorder %v733, 1
        %vm787 = vcmp.eq.s32.totalorder %v737, 1
        %vm788 = vcmp.eq.s32.totalorder %v741, 1
        %vm789 = vcmp.eq.s32.totalorder %v745, 1
        %vm790 = vcmp.eq.s32.totalorder %v749, 1
        %vm791 = vcmp.eq.s32.totalorder %v753, 1
        %vm792 = vcmp.eq.s32.totalorder %v757, 1
        %vm793 = vcmp.eq.s32.totalorder %v761, 1
        %vm794 = vcmp.eq.s32.totalorder %v765, 1
        %vm795 = vcmp.eq.s32.totalorder %v769, 1
        %vm796 = vcmp.eq.s32.totalorder %v773, 1
        %vm797 = vcmp.eq.s32.totalorder %v777, 1
        %v798 = vsel %vm778, %v566, 0.0
        %v799 = vsel %vm779, %v567, 0.0
        %v800 = vsel %vm780, %v568, 0.0
        %v801 = vsel %vm781, %v569, 0.0
        %v802 = vsel %vm782, %v570, 0.0
        %v803 = vsel %vm783, %v571, 0.0
        %v804 = vsel %vm784, %v572, 0.0
        %v805 = vsel %vm785, %v573, 0.0
        %v806 = vsel %vm786, %v574, 0.0
        %v807 = vsel %vm787, %v575, 0.0
        %v808 = vsel %vm788, %v576, 0.0
        %v809 = vsel %vm789, %v577, 0.0
        %v810 = vsel %vm790, %v578, 0.0
        %v811 = vsel %vm791, %v579, 0.0
        %v812 = vsel %vm792, %v580, 0.0
        %v813 = vsel %vm793, %v581, 0.0
        %v814 = vsel %vm794, %v582, 0.0
        %v815 = vsel %vm795, %v583, 0.0
        %v816 = vsel %vm796, %v584, 0.0
        %v817 = vsel %vm797, %v585, 0.0
        %v818 = vsel %vm778, %v586, 0.0
        %v819 = vsel %vm779, %v587, 0.0
        %v820 = vsel %vm780, %v588, 0.0
        %v821 = vsel %vm781, %v589, 0.0
        %v822 = vsel %vm782, %v590, 0.0
        %v823 = vsel %vm783, %v591, 0.0
        %v824 = vsel %vm784, %v592, 0.0
        %v825 = vsel %vm785, %v593, 0.0
        %v826 = vsel %vm786, %v594, 0.0
        %v827 = vsel %vm787, %v595, 0.0
        %v828 = vsel %vm788, %v596, 0.0
        %v829 = vsel %vm789, %v597, 0.0
        %v830 = vsel %vm790, %v598, 0.0
        %v831 = vsel %vm791, %v599, 0.0
        %v832 = vsel %vm792, %v600, 0.0
        %v833 = vsel %vm793, %v601, 0.0
        %v834 = vsel %vm794, %v602, 0.0
        %v835 = vsel %vm795, %v603, 0.0
        %v836 = vsel %vm796, %v604, 0.0
        %v837 = vsel %vm797, %v605, 0.0
        %v838 = vadd.f32 %v798, %v799
        %v839 = vadd.f32 %v838, %v800
        %v840 = vadd.f32 %v839, %v801
        %v841 = vadd.f32 %v840, %v802
        %v842 = vadd.f32 %v841, %v803
        %v843 = vadd.f32 %v842, %v804
        %v844 = vadd.f32 %v843, %v805
        %v845 = vadd.f32 %v844, %v806
        %v846 = vadd.f32 %v845, %v807
        %v847 = vadd.f32 %v846, %v808
        %v848 = vadd.f32 %v847, %v809
        %v849 = vadd.f32 %v848, %v810
        %v850 = vadd.f32 %v849, %v811
        %v851 = vadd.f32 %v850, %v812
        %v852 = vadd.f32 %v851, %v813
        %v853 = vadd.f32 %v852, %v814
        %v854 = vadd.f32 %v853, %v815
        %v855 = vadd.f32 %v854, %v816
        %vm856 = vcmask 228352
        %v857 = vsel %vm856, %v817, 0.0
        %v858 = vadd.f32 %v855, %v857
        %859 = vadd.xlane.f32.xlu0 %v858
        %v860 = vpop.xlane.xlu0 %859
        %v861 = vsel %vm332, %v818, 0.0
        %v862 = vsel %vm332, %v819, 0.0
        %v863 = vadd.f32 %v861, %v862
        %v864 = vsel %vm332, %v820, 0.0
        %v865 = vadd.f32 %v863, %v864
        %v866 = vsel %vm332, %v821, 0.0
        %v867 = vadd.f32 %v865, %v866
        %v868 = vsel %vm332, %v822, 0.0
        %v869 = vadd.f32 %v867, %v868
        %v870 = vsel %vm332, %v823, 0.0
        %v871 = vadd.f32 %v869, %v870
        %v872 = vsel %vm332, %v824, 0.0
        %v873 = vadd.f32 %v871, %v872
        %v874 = vsel %vm332, %v825, 0.0
        %v875 = vadd.f32 %v873, %v874
        %v876 = vsel %vm332, %v826, 0.0
        %v877 = vadd.f32 %v875, %v876
        %v878 = vsel %vm332, %v827, 0.0
        %v879 = vadd.f32 %v877, %v878
        %v880 = vsel %vm332, %v828, 0.0
        %v881 = vadd.f32 %v879, %v880
        %v882 = vsel %vm332, %v829, 0.0
        %v883 = vadd.f32 %v881, %v882
        %v884 = vsel %vm332, %v830, 0.0
        %v885 = vadd.f32 %v883, %v884
        %v886 = vsel %vm332, %v831, 0.0
        %v887 = vadd.f32 %v885, %v886
        %v888 = vsel %vm332, %v832, 0.0
        %v889 = vadd.f32 %v887, %v888
        %v890 = vsel %vm332, %v833, 0.0
        %v891 = vadd.f32 %v889, %v890
        %v892 = vsel %vm332, %v834, 0.0
        %v893 = vadd.f32 %v891, %v892
        %v894 = vsel %vm332, %v835, 0.0
        %v895 = vadd.f32 %v893, %v894
        %v896 = vsel %vm332, %v836, 0.0
        %v897 = vadd.f32 %v895, %v896
        %v898 = vsel %vm370, %v837, 0.0
        %v899 = vadd.f32 %v897, %v898
        %900 = vadd.xlane.f32.xlu0 %v899
        %v901 = vpop.xlane.xlu0 %900
        %v903 = vlaneseq
        %v904 = vshrl.u32 %v903, 7
        %v905 = vsub.s32 0, %v904
        %v906 = vrot.slane %v606, %v905
        %908 = vbcast.lane.b32.xlu0 %v906, 256
        %v909 = vpop.permute.xlu0 %908
        %s911 = sor.u32 256, 8
        %912 = vbcast.lane.b32.xlu0 %v906, %s911
        %v913 = vpop.permute.xlu0 %912
        %v916 = vadd.f32 %v860, %v909
        %v917 = vadd.f32 %v901, %v913
        %vm918 = vcmask 7168
        %v919 = vsel %vm918, %v916, -inf
        %vm920 = vcmask 1024
        %v921 = vsel %vm920, %v917, -inf
        %v922 = vmax.f32 %v919, %v921
        %v923 = vrot.slane %v922, 4
        %v924 = vmax.f32 %v922, %v923
        %v925 = vrot.slane %v924, 2
        %v926 = vmax.f32 %v924, %v925
        %v927 = vrot.slane %v926, 1
        %v928 = vmax.f32 %v926, %v927
        %s929 = vtos %v928
        %v930 = vstv %s929
        %v931 = vsub.f32 %v916, %v930
        %v932 = vsub.f32 %v917, %v930
        %v933 = vmul.f32 %v931, 1.442695
        %v934 = vpow.pop %v933
        %v935 = vmul.f32 %v932, 1.442695
        %v936 = vpow.pop %v935
        %939 = vset.pattern.permute.xlu0 0
        %940 = vperm.xlu0 %939, %v934
        %v941 = vpop.permute.xlu0 %940
        %942 = vset.pattern.permute.xlu0 0
        %943 = vperm.xlu0 %942, %v936
        %v944 = vpop.permute.xlu0 %943
        %v945 = vlaneseq
        %v946 = vand.u32 %v945, 127
        %v947 = vlaneseq
        %v948 = vshrl.u32 %v947, 7
        %v949 = vsub.s32 %v946, %v948
        %v950 = vrot.slane %v941, %v949
        %v951 = vadd.s32 %v946, 4294967288
        %v952 = vlaneseq
        %v953 = vshrl.u32 %v952, 7
        %v954 = vsub.s32 %v951, %v953
        %v955 = vrot.slane %v944, %v954
        %vm956 = vcmask 130112
        %v957 = vsel %vm956, %v955, %v950
        %vm959 = vcmask 73728
        %v960 = vsel %vm959, %v957, 0.0
        %961 = vadd.xlane.f32.xlu0 %v960
        %v962 = vpop.xlane.xlu0 %961
        %v963 = vrot.slane %v962, 4
        %v964 = vadd.f32 %v962, %v963
        %v965 = vrot.slane %v964, 2
        %v966 = vadd.f32 %v964, %v965
        %v967 = vrot.slane %v966, 1
        %v968 = vadd.f32 %v966, %v967
        %s969 = vtos %v968
        %v970 = vstv %s969
        %v971 = vrcp.pop %v970
        %v972 = vmul.f32 %v934, %v971
        %v973 = vmul.f32 %v936, %v971
        %976 = vset.pattern.permute.xlu0 0
        %977 = vperm.xlu0 %976, %v972
        %v978 = vpop.permute.xlu0 %977
        %979 = vset.pattern.permute.xlu0 0
        %980 = vperm.xlu0 %979, %v973
        %v981 = vpop.permute.xlu0 %980
        %v982 = vlaneseq
        %v983 = vshrl.u32 %v982, 7
        %v984 = vsub.s32 %v946, %v983
        %v985 = vrot.slane %v978, %v984
        %v986 = vlaneseq
        %v987 = vshrl.u32 %v986, 7
        %v988 = vsub.s32 %v951, %v987
        %v989 = vrot.slane %v981, %v988
        %v990 = vsel %vm956, %v989, %v985
        %992 = vst.msk [vmem:[%s201] sm:$0x1] %vm959, %v990
        %v993 = vlaneseq
        %v994 = vshrl.u32 %v993, 7
        %v995 = vsub.s32 1, %v994
        %v996 = vrot.slane %v613, %v995
        %v997 = vlaneseq
        %v998 = vshrl.u32 %v997, 7
        %v999 = vsub.s32 3, %v998
        %v1000 = vrot.slane %v613, %v999
        %v1001 = vlaneseq
        %v1002 = vshrl.u32 %v1001, 7
        %v1003 = vsub.s32 5, %v1002
        %v1004 = vrot.slane %v613, %v1003
        %v1005 = vlaneseq
        %v1006 = vshrl.u32 %v1005, 7
        %v1007 = vsub.s32 7, %v1006
        %v1008 = vrot.slane %v613, %v1007
        %v1009 = vlaneseq
        %v1010 = vshrl.u32 %v1009, 7
        %v1011 = vsub.s32 1, %v1010
        %v1012 = vrot.slane %v614, %v1011
        %v1013 = vlaneseq
        %v1014 = vshrl.u32 %v1013, 7
        %v1015 = vsub.s32 3, %v1014
        %v1016 = vrot.slane %v614, %v1015
        %v1017 = vlaneseq
        %v1018 = vshrl.u32 %v1017, 7
        %v1019 = vsub.s32 5, %v1018
        %v1020 = vrot.slane %v614, %v1019
        %v1021 = vlaneseq
        %v1022 = vshrl.u32 %v1021, 7
        %v1023 = vsub.s32 7, %v1022
        %v1024 = vrot.slane %v614, %v1023
        %v1025 = vlaneseq
        %v1026 = vshrl.u32 %v1025, 7
        %v1027 = vsub.s32 1, %v1026
        %v1028 = vrot.slane %v615, %v1027
        %v1029 = vlaneseq
        %v1030 = vshrl.u32 %v1029, 7
        %v1031 = vsub.s32 3, %v1030
        %v1032 = vrot.slane %v615, %v1031
        %v1033 = vlaneseq
        %v1034 = vshrl.u32 %v1033, 7
        %v1035 = vsub.s32 5, %v1034
        %v1036 = vrot.slane %v615, %v1035
        %v1037 = vlaneseq
        %v1038 = vshrl.u32 %v1037, 7
        %v1039 = vsub.s32 7, %v1038
        %v1040 = vrot.slane %v615, %v1039
        %v1041 = vlaneseq
        %v1042 = vshrl.u32 %v1041, 7
        %v1043 = vsub.s32 1, %v1042
        %v1044 = vrot.slane %v616, %v1043
        %v1045 = vlaneseq
        %v1046 = vshrl.u32 %v1045, 7
        %v1047 = vsub.s32 3, %v1046
        %v1048 = vrot.slane %v616, %v1047
        %v1049 = vlaneseq
        %v1050 = vshrl.u32 %v1049, 7
        %v1051 = vsub.s32 5, %v1050
        %v1052 = vrot.slane %v616, %v1051
        %v1053 = vlaneseq
        %v1054 = vshrl.u32 %v1053, 7
        %v1055 = vsub.s32 7, %v1054
        %v1056 = vrot.slane %v616, %v1055
        %v1057 = vlaneseq
        %v1058 = vshrl.u32 %v1057, 7
        %v1059 = vsub.s32 1, %v1058
        %v1060 = vrot.slane %v617, %v1059
        %v1061 = vlaneseq
        %v1062 = vshrl.u32 %v1061, 7
        %v1063 = vsub.s32 3, %v1062
        %v1064 = vrot.slane %v617, %v1063
        %v1065 = vlaneseq
        %v1066 = vshrl.u32 %v1065, 7
        %v1067 = vsub.s32 5, %v1066
        %v1068 = vrot.slane %v617, %v1067
        %v1069 = vlaneseq
        %v1070 = vshrl.u32 %v1069, 7
        %v1071 = vsub.s32 7, %v1070
        %v1072 = vrot.slane %v617, %v1071
        %v1073 = vlaneseq
        %v1074 = vshrl.u32 %v1073, 7
        %v1075 = vsub.s32 1, %v1074
        %v1076 = vrot.slane %v996, %v1075
        %v1077 = vlaneseq
        %v1078 = vshrl.u32 %v1077, 7
        %v1079 = vsub.s32 1, %v1078
        %v1080 = vrot.slane %v1000, %v1079
        %v1081 = vlaneseq
        %v1082 = vshrl.u32 %v1081, 7
        %v1083 = vsub.s32 1, %v1082
        %v1084 = vrot.slane %v1004, %v1083
        %v1085 = vlaneseq
        %v1086 = vshrl.u32 %v1085, 7
        %v1087 = vsub.s32 1, %v1086
        %v1088 = vrot.slane %v1008, %v1087
        %v1089 = vlaneseq
        %v1090 = vshrl.u32 %v1089, 7
        %v1091 = vsub.s32 1, %v1090
        %v1092 = vrot.slane %v1012, %v1091
        %v1093 = vlaneseq
        %v1094 = vshrl.u32 %v1093, 7
        %v1095 = vsub.s32 1, %v1094
        %v1096 = vrot.slane %v1016, %v1095
        %v1097 = vlaneseq
        %v1098 = vshrl.u32 %v1097, 7
        %v1099 = vsub.s32 1, %v1098
        %v1100 = vrot.slane %v1020, %v1099
        %v1101 = vlaneseq
        %v1102 = vshrl.u32 %v1101, 7
        %v1103 = vsub.s32 1, %v1102
        %v1104 = vrot.slane %v1024, %v1103
        %v1105 = vlaneseq
        %v1106 = vshrl.u32 %v1105, 7
        %v1107 = vsub.s32 1, %v1106
        %v1108 = vrot.slane %v1028, %v1107
        %v1109 = vlaneseq
        %v1110 = vshrl.u32 %v1109, 7
        %v1111 = vsub.s32 1, %v1110
        %v1112 = vrot.slane %v1032, %v1111
        %v1113 = vlaneseq
        %v1114 = vshrl.u32 %v1113, 7
        %v1115 = vsub.s32 1, %v1114
        %v1116 = vrot.slane %v1036, %v1115
        %v1117 = vlaneseq
        %v1118 = vshrl.u32 %v1117, 7
        %v1119 = vsub.s32 1, %v1118
        %v1120 = vrot.slane %v1040, %v1119
        %v1121 = vlaneseq
        %v1122 = vshrl.u32 %v1121, 7
        %v1123 = vsub.s32 1, %v1122
        %v1124 = vrot.slane %v1044, %v1123
        %v1125 = vlaneseq
        %v1126 = vshrl.u32 %v1125, 7
        %v1127 = vsub.s32 1, %v1126
        %v1128 = vrot.slane %v1048, %v1127
        %v1129 = vlaneseq
        %v1130 = vshrl.u32 %v1129, 7
        %v1131 = vsub.s32 1, %v1130
        %v1132 = vrot.slane %v1052, %v1131
        %v1133 = vlaneseq
        %v1134 = vshrl.u32 %v1133, 7
        %v1135 = vsub.s32 1, %v1134
        %v1136 = vrot.slane %v1056, %v1135
        %v1137 = vlaneseq
        %v1138 = vshrl.u32 %v1137, 7
        %v1139 = vsub.s32 1, %v1138
        %v1140 = vrot.slane %v1060, %v1139
        %v1141 = vlaneseq
        %v1142 = vshrl.u32 %v1141, 7
        %v1143 = vsub.s32 1, %v1142
        %v1144 = vrot.slane %v1064, %v1143
        %v1145 = vlaneseq
        %v1146 = vshrl.u32 %v1145, 7
        %v1147 = vsub.s32 1, %v1146
        %v1148 = vrot.slane %v1068, %v1147
        %v1149 = vlaneseq
        %v1150 = vshrl.u32 %v1149, 7
        %v1151 = vsub.s32 1, %v1150
        %v1152 = vrot.slane %v1072, %v1151
        %vm1153 = vcmp.eq.s32.totalorder %v1076, 1
        %vm1154 = vcmp.eq.s32.totalorder %v1080, 1
        %vm1155 = vcmp.eq.s32.totalorder %v1084, 1
        %vm1156 = vcmp.eq.s32.totalorder %v1088, 1
        %vm1157 = vcmp.eq.s32.totalorder %v1092, 1
        %vm1158 = vcmp.eq.s32.totalorder %v1096, 1
        %vm1159 = vcmp.eq.s32.totalorder %v1100, 1
        %vm1160 = vcmp.eq.s32.totalorder %v1104, 1
        %vm1161 = vcmp.eq.s32.totalorder %v1108, 1
        %vm1162 = vcmp.eq.s32.totalorder %v1112, 1
        %vm1163 = vcmp.eq.s32.totalorder %v1116, 1
        %vm1164 = vcmp.eq.s32.totalorder %v1120, 1
        %vm1165 = vcmp.eq.s32.totalorder %v1124, 1
        %vm1166 = vcmp.eq.s32.totalorder %v1128, 1
        %vm1167 = vcmp.eq.s32.totalorder %v1132, 1
        %vm1168 = vcmp.eq.s32.totalorder %v1136, 1
        %vm1169 = vcmp.eq.s32.totalorder %v1140, 1
        %vm1170 = vcmp.eq.s32.totalorder %v1144, 1
        %vm1171 = vcmp.eq.s32.totalorder %v1148, 1
        %vm1172 = vcmp.eq.s32.totalorder %v1152, 1
        %v1173 = vsel %vm1153, %v566, 0.0
        %v1174 = vsel %vm1154, %v567, 0.0
        %v1175 = vsel %vm1155, %v568, 0.0
        %v1176 = vsel %vm1156, %v569, 0.0
        %v1177 = vsel %vm1157, %v570, 0.0
        %v1178 = vsel %vm1158, %v571, 0.0
        %v1179 = vsel %vm1159, %v572, 0.0
        %v1180 = vsel %vm1160, %v573, 0.0
        %v1181 = vsel %vm1161, %v574, 0.0
        %v1182 = vsel %vm1162, %v575, 0.0
        %v1183 = vsel %vm1163, %v576, 0.0
        %v1184 = vsel %vm1164, %v577, 0.0
        %v1185 = vsel %vm1165, %v578, 0.0
        %v1186 = vsel %vm1166, %v579, 0.0
        %v1187 = vsel %vm1167, %v580, 0.0
        %v1188 = vsel %vm1168, %v581, 0.0
        %v1189 = vsel %vm1169, %v582, 0.0
        %v1190 = vsel %vm1170, %v583, 0.0
        %v1191 = vsel %vm1171, %v584, 0.0
        %v1192 = vsel %vm1172, %v585, 0.0
        %v1193 = vsel %vm1153, %v586, 0.0
        %v1194 = vsel %vm1154, %v587, 0.0
        %v1195 = vsel %vm1155, %v588, 0.0
        %v1196 = vsel %vm1156, %v589, 0.0
        %v1197 = vsel %vm1157, %v590, 0.0
        %v1198 = vsel %vm1158, %v591, 0.0
        %v1199 = vsel %vm1159, %v592, 0.0
        %v1200 = vsel %vm1160, %v593, 0.0
        %v1201 = vsel %vm1161, %v594, 0.0
        %v1202 = vsel %vm1162, %v595, 0.0
        %v1203 = vsel %vm1163, %v596, 0.0
        %v1204 = vsel %vm1164, %v597, 0.0
        %v1205 = vsel %vm1165, %v598, 0.0
        %v1206 = vsel %vm1166, %v599, 0.0
        %v1207 = vsel %vm1167, %v600, 0.0
        %v1208 = vsel %vm1168, %v601, 0.0
        %v1209 = vsel %vm1169, %v602, 0.0
        %v1210 = vsel %vm1170, %v603, 0.0
        %v1211 = vsel %vm1171, %v604, 0.0
        %v1212 = vsel %vm1172, %v605, 0.0
        %v1213 = vadd.f32 %v1173, %v1174
        %v1214 = vadd.f32 %v1213, %v1175
        %v1215 = vadd.f32 %v1214, %v1176
        %v1216 = vadd.f32 %v1215, %v1177
        %v1217 = vadd.f32 %v1216, %v1178
        %v1218 = vadd.f32 %v1217, %v1179
        %v1219 = vadd.f32 %v1218, %v1180
        %v1220 = vadd.f32 %v1219, %v1181
        %v1221 = vadd.f32 %v1220, %v1182
        %v1222 = vadd.f32 %v1221, %v1183
        %v1223 = vadd.f32 %v1222, %v1184
        %v1224 = vadd.f32 %v1223, %v1185
        %v1225 = vadd.f32 %v1224, %v1186
        %v1226 = vadd.f32 %v1225, %v1187
        %v1227 = vadd.f32 %v1226, %v1188
        %v1228 = vadd.f32 %v1227, %v1189
        %v1229 = vadd.f32 %v1228, %v1190
        %v1230 = vadd.f32 %v1229, %v1191
        %v1231 = vsel %vm856, %v1192, 0.0
        %v1232 = vadd.f32 %v1230, %v1231
        %1233 = vadd.xlane.f32.xlu0 %v1232
        %v1234 = vpop.xlane.xlu0 %1233
        %v1235 = vsel %vm332, %v1193, 0.0
        %v1236 = vsel %vm332, %v1194, 0.0
        %v1237 = vadd.f32 %v1235, %v1236
        %v1238 = vsel %vm332, %v1195, 0.0
        %v1239 = vadd.f32 %v1237, %v1238
        %v1240 = vsel %vm332, %v1196, 0.0
        %v1241 = vadd.f32 %v1239, %v1240
        %v1242 = vsel %vm332, %v1197, 0.0
        %v1243 = vadd.f32 %v1241, %v1242
        %v1244 = vsel %vm332, %v1198, 0.0
        %v1245 = vadd.f32 %v1243, %v1244
        %v1246 = vsel %vm332, %v1199, 0.0
        %v1247 = vadd.f32 %v1245, %v1246
        %v1248 = vsel %vm332, %v1200, 0.0
        %v1249 = vadd.f32 %v1247, %v1248
        %v1250 = vsel %vm332, %v1201, 0.0
        %v1251 = vadd.f32 %v1249, %v1250
        %v1252 = vsel %vm332, %v1202, 0.0
        %v1253 = vadd.f32 %v1251, %v1252
        %v1254 = vsel %vm332, %v1203, 0.0
        %v1255 = vadd.f32 %v1253, %v1254
        %v1256 = vsel %vm332, %v1204, 0.0
        %v1257 = vadd.f32 %v1255, %v1256
        %v1258 = vsel %vm332, %v1205, 0.0
        %v1259 = vadd.f32 %v1257, %v1258
        %v1260 = vsel %vm332, %v1206, 0.0
        %v1261 = vadd.f32 %v1259, %v1260
        %v1262 = vsel %vm332, %v1207, 0.0
        %v1263 = vadd.f32 %v1261, %v1262
        %v1264 = vsel %vm332, %v1208, 0.0
        %v1265 = vadd.f32 %v1263, %v1264
        %v1266 = vsel %vm332, %v1209, 0.0
        %v1267 = vadd.f32 %v1265, %v1266
        %v1268 = vsel %vm332, %v1210, 0.0
        %v1269 = vadd.f32 %v1267, %v1268
        %v1270 = vsel %vm332, %v1211, 0.0
        %v1271 = vadd.f32 %v1269, %v1270
        %v1272 = vsel %vm370, %v1212, 0.0
        %v1273 = vadd.f32 %v1271, %v1272
        %1274 = vadd.xlane.f32.xlu0 %v1273
        %v1275 = vpop.xlane.xlu0 %1274
        %v1276 = vadd.f32 %v1234, %v909
        %v1277 = vadd.f32 %v1275, %v913
        %v1278 = vsel %vm918, %v1276, -inf
        %v1279 = vsel %vm920, %v1277, -inf
        %v1280 = vmax.f32 %v1278, %v1279
        %v1281 = vrot.slane %v1280, 4
        %v1282 = vmax.f32 %v1280, %v1281
        %v1283 = vrot.slane %v1282, 2
        %v1284 = vmax.f32 %v1282, %v1283
        %v1285 = vrot.slane %v1284, 1
        %v1286 = vmax.f32 %v1284, %v1285
        %s1287 = vtos %v1286
        %v1288 = vstv %s1287
        %v1289 = vsub.f32 %v1276, %v1288
        %v1290 = vsub.f32 %v1277, %v1288
        %v1291 = vmul.f32 %v1289, 1.442695
        %v1292 = vpow.pop %v1291
        %v1293 = vmul.f32 %v1290, 1.442695
        %v1294 = vpow.pop %v1293
        %1297 = vset.pattern.permute.xlu0 0
        %1298 = vperm.xlu0 %1297, %v1292
        %v1299 = vpop.permute.xlu0 %1298
        %1300 = vset.pattern.permute.xlu0 0
        %1301 = vperm.xlu0 %1300, %v1294
        %v1302 = vpop.permute.xlu0 %1301
        %v1303 = vlaneseq
        %v1304 = vshrl.u32 %v1303, 7
        %v1305 = vsub.s32 %v946, %v1304
        %v1306 = vrot.slane %v1299, %v1305
        %v1307 = vlaneseq
        %v1308 = vshrl.u32 %v1307, 7
        %v1309 = vsub.s32 %v951, %v1308
        %v1310 = vrot.slane %v1302, %v1309
        %v1311 = vsel %vm956, %v1310, %v1306
        %v1313 = vsel %vm959, %v1311, 0.0
        %1314 = vadd.xlane.f32.xlu0 %v1313
        %v1315 = vpop.xlane.xlu0 %1314
        %v1316 = vrot.slane %v1315, 4
        %v1317 = vadd.f32 %v1315, %v1316
        %v1318 = vrot.slane %v1317, 2
        %v1319 = vadd.f32 %v1317, %v1318
        %v1320 = vrot.slane %v1319, 1
        %v1321 = vadd.f32 %v1319, %v1320
        %s1322 = vtos %v1321
        %v1323 = vstv %s1322
        %v1324 = vrcp.pop %v1323
        %v1325 = vmul.f32 %v1292, %v1324
        %v1326 = vmul.f32 %v1294, %v1324
        %1329 = vset.pattern.permute.xlu0 0
        %1330 = vperm.xlu0 %1329, %v1325
        %v1331 = vpop.permute.xlu0 %1330
        %1332 = vset.pattern.permute.xlu0 0
        %1333 = vperm.xlu0 %1332, %v1326
        %v1334 = vpop.permute.xlu0 %1333
        %v1335 = vlaneseq
        %v1336 = vshrl.u32 %v1335, 7
        %v1337 = vsub.s32 %v946, %v1336
        %v1338 = vrot.slane %v1331, %v1337
        %v1339 = vlaneseq
        %v1340 = vshrl.u32 %v1339, 7
        %v1341 = vsub.s32 %v951, %v1340
        %v1342 = vrot.slane %v1334, %v1341
        %v1343 = vsel %vm956, %v1342, %v1338
        %1345 = vst.msk [vmem:[%s201 + $0x1] sm:$0x1] %vm959, %v1343
        %s1346 = sand.u32 %s97, 1
        %s1347 = scalar_lea.sflag [#allocation4], %s1346
        %s1348 = sand.u32 %s97, 1
        %s1349 = smul.addr %s1348, 2
        %s1350 = scalar_lea.vmem [#allocation7], %s1349
        // Predicated region
        $region41: #{tpu_custom_call.1} parent=31 // pred_check
          %p1351 = pneg %p107
        $region42: #{tpu_custom_call.1} parent=31 // pred_check_branch
          %1353 = sbr.rel (%p1351) target = $region44
        $region43: #{tpu_custom_call.1} parent=31 // pred_region
          %s1355 = ssub.s32 32, 32
          %1356 = vsyncadd %s1347, %s1355
          %s1357 = smul.addr %s21, 32
          %s1358 = scalar_lea.hbm %s3, %s1357
          %s1360 = sshll.u32 %s1350, 4
          %s1361 = int_to_ptr.vmem [resolvable:$true] %s1360
          %1363 = dma.vmem_to_hbm [thread:$0]  %s1361, 32, %s1358, %s1347
        $region44: #{tpu_custom_call.1} parent=31 // pred_fallthru
          _
      $region32: #{tpu_custom_call.1} parent=5 // pred_fallthru
        _
      %p1364 = scmp.le.s32.totalorder 2, %s16
      // Predicated region
      $region45: #{tpu_custom_call.1} parent=5 // pred_check
        %p1365 = pneg %p1364
      $region46: #{tpu_custom_call.1} parent=5 // pred_check_branch
        %1367 = sbr.rel (%p1365) target = $region48
      $region47: #{tpu_custom_call.1} parent=5 // pred_region
        %s1368 = ssub.s32 %s16, 2
        // Predicated region
        $region49: #{tpu_custom_call.1} parent=47 // pred_check
          %p1369 = pneg %p113
        $region50: #{tpu_custom_call.1} parent=47 // pred_check_branch
          %1371 = sbr.rel (%p1369) target = $region52
        $region51: #{tpu_custom_call.1} parent=47 // pred_region
          %s1372 = sand.u32 %s98, 1
          %s1373 = scalar_lea.sflag [#allocation4], %s1372
          %s1374 = sand.u32 %s98, 1
          %s1375 = smul.addr %s1374, 2
          %s1376 = scalar_lea.vmem [#allocation7], %s1375
          %1377 = dma.done %s1373, 32
        $region52: #{tpu_custom_call.1} parent=47 // pred_fallthru
          _
      $region48: #{tpu_custom_call.1} parent=5 // pred_fallthru
        _
    $region6: #{tpu_custom_call.1} parent=1 // loop_footer
      %s20 = sadd.s32 1, %s16
    $region7: #{tpu_custom_call.1} parent=1 // loop_footer_branch
      %15 = sbr.rel target = $region3
    $region8: #{tpu_custom_call.1} parent=1 // loop_exit
      _
    %1378 = vsyncpa [#allocation3], 1
    %s1379 = scalar_lea.sflag [#allocation3], 1
    %1380 = vsyncpa %s1379, 1
    %1381 = vsyncpa [#allocation6], 1
    %1382 = vsyncpa [#allocation4], 1
    %s1383 = scalar_lea.sflag [#allocation4], 1
    %1384 = vsyncpa %s1383, 1

</llo_original>
